<compile_context>
chip_gen: v7x
topology: tpu7x:2x2x1
jax: 0.10.0
libtpu: 0.0.40
codegen_flags: <defaults>
</compile_context>

<pallas_src>
import functools

import numpy as np
import jax
import jax.numpy as jnp
from jax.experimental import pallas as pl
from jax.experimental.pallas import tpu as pltpu


# ----------------------------------------------------------------------------
# Fused decoder kernel: single grid step, batch folded onto lanes, all layers
# back-to-back with activations resident in VMEM/vregs.
# ----------------------------------------------------------------------------
def _decoder_fused_kernel(x_ref, *refs, acts, seg_len, neg_slope):
    # refs = (w1, bss1, w2, bss2, w3, bss3, o_ref)
    #   w:   (P_out*C_out, 3*P_in*C_in)  packed polyphase weights
    #   bss: (3, P_out*C_out, 1)         f32 [bias, bn_scale, bn_shift]
    o_ref = refs[-1]
    wrefs = refs[:-1]
    batch = x_ref.shape[0]

    # Fold the batch onto the lane axis: (C0, B*T), column index = b*T + q.
    a = jnp.concatenate([x_ref[b] for b in range(batch)], axis=-1)
    a = a.astype(jnp.float32)
    bt = a.shape[-1]

    # Columns whose (q+1) / (q-1) neighbour would cross a batch-segment
    # boundary.  seg_len/batch are static, so this is a handful of compares.
    lane = jax.lax.broadcasted_iota(jnp.int32, (1, bt), 1)
    keep_next = lane != (seg_len - 1)
    keep_prev = lane != 0
    for b in range(1, batch):
        keep_next = jnp.logical_and(keep_next, lane != ((b + 1) * seg_len - 1))
        keep_prev = jnp.logical_and(keep_prev, lane != b * seg_len)

    for li, act in enumerate(acts):
        w_ref, bss_ref = wrefs[2 * li], wrefs[2 * li + 1]
        w = w_ref[...]                                    # (R_out, 3*R_in)

        # Shifted im2col stack [A(q+1); A(q); A(q-1)], in the matmul dtype
        # (bf16 fast path / f32 exact path).
        x = a.astype(w.dtype)                             # (R_in, B*T)
        zcol = jnp.zeros((x.shape[0], 1), x.dtype)
        x_next = jnp.concatenate([x[:, 1:], zcol], axis=-1)
        x_prev = jnp.concatenate([zcol, x[:, :-1]], axis=-1)
        x_next = jnp.where(keep_next, x_next, 0)
        x_prev = jnp.where(keep_prev, x_prev, 0)
        stack = jnp.concatenate([x_next, x, x_prev], axis=0)   # (3*R_in, B*T)

        # ONE MXU matmul per layer, f32 accumulation.
        y = jax.lax.dot_general(
            w, stack,
            dimension_numbers=(((1,), (0,)), ((), ())),
            preferred_element_type=jnp.float32)           # (R_out, B*T) f32

        y = y + bss_ref[0]                                # bias (R_out, 1)
        if act:
            y = jnp.maximum(y, neg_slope * y)             # LeakyReLU(0.01)
            y = y * bss_ref[1] + bss_ref[2]               # BatchNorm (eval)
        a = y                                             # stays in VMEM/vregs

    o_ref[...] = a.astype(o_ref.dtype)                    # (P*C_out, B*T)


# ----------------------------------------------------------------------------
# Host-side parameter packing (done once, outside the forward pass).
# Packs each layer into the polyphase matmul weight acting on the generic
# shifted stack [A(q+1); A(q); A(q-1)], plus one (3, R, 1) bias/scale/shift.
# ----------------------------------------------------------------------------
def pack_decoder_params(layers, compute_dtype=jnp.float32):
    packed = []
    p_in = 1
    for lyr in layers:
        w = np.asarray(lyr["W"], np.float32)
        if lyr["type"] == "conv":
            cout, cin, kk = w.shape                       # (Cout, Cin, K)
            stride, pad = 1, kk // 2
            p_out = p_in
            taps = [w[:, :, k] for k in range(kk)]        # (Cout, Cin)
        else:
            cin, cout, kk = w.shape                       # (Cin, Cout, K)
            stride = int(lyr["stride"])
            pad = stride // 2
            p_out = p_in * stride
            taps = [w[:, :, k].T for k in range(kk)]      # (Cout, Cin)

        wp = np.zeros((p_out * cout, 3 * p_in * cin), np.float32)
        for r in range(p_out):                            # output phase
            for k in range(kk):                           # tap
                if lyr["type"] == "conv":
                    delta = r + k - pad                   # logical input offset
                else:
                    num = r + pad - k
                    if num % stride:
                        continue                          # tap hits no sample
                    delta = num // stride
                ph_in = delta % p_in                      # input phase
                shift = (delta - ph_in) // p_in           # base-index shift
                assert shift in (-1, 0, 1), (shift, r, k)
                blk = {1: 0, 0: 1, -1: 2}[shift]          # stack order [q+1,q,q-1]
                c0 = blk * p_in * cin + ph_in * cin
                wp[r * cout:(r + 1) * cout, c0:c0 + cin] += taps[k]

        bss = np.stack([np.tile(np.asarray(lyr[n], np.float32), p_out)
                        for n in ("b", "scale", "shift")], axis=0)
        packed.append(dict(
            act=bool(lyr["act"]), p_out=p_out, cout=int(cout),
            w=jnp.asarray(wp, compute_dtype),
            bss=jnp.asarray(bss.reshape(3, p_out * cout, 1), jnp.float32)))
        p_in = p_out
    return packed


# ----------------------------------------------------------------------------
# Forward pass: exactly one pallas_call; wrapper only de-interleaves phases.
# ----------------------------------------------------------------------------
def conv_decoder_forward(x_ncl, packed):
    B, c0, t = x_ncl.shape
    p_fin, c_fin = packed[-1]["p_out"], packed[-1]["cout"]

    operands = [x_ncl]
    in_specs = [pl.BlockSpec((B, c0, t), lambda i: (0, 0, 0))]
    for pk in packed:
        operands += [pk["w"], pk["bss"]]
        in_specs += [pl.BlockSpec(pk["w"].shape, lambda i: (0, 0)),
                     pl.BlockSpec(pk["bss"].shape, lambda i: (0, 0, 0))]

    kern = functools.partial(_decoder_fused_kernel,
                             acts=tuple(pk["act"] for pk in packed),
                             seg_len=t, neg_slope=0.01)
    y = pl.pallas_call(
        kern,
        out_shape=jax.ShapeDtypeStruct((p_fin * c_fin, B * t), jnp.float32),
        grid=(1,),
        in_specs=in_specs,
        out_specs=pl.BlockSpec((p_fin * c_fin, B * t), lambda i: (0, 0)),
        compiler_params=pltpu.CompilerParams(
            dimension_semantics=("arbitrary",)),
    )(*operands)

    # Phase de-interleave (wrapper-side layout plumbing):
    #   y[r*C + c, b*T + q]  ->  out[b, c, P*q + r]
    y = y.reshape(p_fin, c_fin, B, t)
    y = jnp.transpose(y, (2, 1, 3, 0)).reshape(B, c_fin, p_fin * t)
    return y


# ----------------------------------------------------------------------------
# Pure-JAX reference (lax conv) used only for correctness assertions.
# ----------------------------------------------------------------------------
def conv_decoder_reference(x_ncl, layers):
    x = x_ncl
    for lyr in layers:
        if lyr["type"] == "conv":
            W = lyr["W"]                       # (Cout, Cin, K)
            K = W.shape[-1]
            p = K // 2
            y = jax.lax.conv_general_dilated(
                x, W, (1,), [(p, p)],
                dimension_numbers=("NCH", "OIH", "NCH"))
        else:
            W = lyr["W"]                       # (Cin, Cout, K)
            K = W.shape[-1]
            s = lyr["stride"]
            p = s // 2
            Wc = jnp.transpose(jnp.flip(W, -1), (1, 0, 2))  # (Cout, Cin, K)
            y = jax.lax.conv_general_dilated(
                x, Wc, (1,), [(K - 1 - p, K - 1 - p)],
                lhs_dilation=(s,),
                dimension_numbers=("NCH", "OIH", "NCH"))
        y = y + lyr["b"][None, :, None]
        if lyr["act"]:
            y = jnp.where(y >= 0, y, 0.01 * y)
            y = y * lyr["scale"][None, :, None] + lyr["shift"][None, :, None]
        x = y
    return x


# ----------------------------------------------------------------------------
# Deterministic parameter construction mirroring ConvDecoder.__init__.
# ----------------------------------------------------------------------------
def build_conv_decoder_params(key, channels, ratios, kernel,
                              extract_loudness=False):
    ch = list(channels)
    ch[0] *= 2
    ch[-1] //= 2
    if extract_loudness:
        ch[-1] += 1
    layers = []
    for i in reversed(range(len(ratios))):
        cin, cout = ch[i + 1], ch[i]
        key, k1, k2, k3, k4, k5, k6 = jax.random.split(key, 7)
        if ratios[i] == 1:
            W = 0.1 * jax.random.normal(k1, (cout, cin, kernel), jnp.float32)
            lyr = dict(type="conv", W=W, stride=1)
        else:
            r = int(ratios[i])
            W = 0.1 * jax.random.normal(k1, (cin, cout, 2 * r), jnp.float32)
            lyr = dict(type="convT", W=W, stride=r)
        lyr["b"] = 0.1 * jax.random.normal(k2, (cout,), jnp.float32)
        if i:
            gamma = 1.0 + 0.1 * jax.random.normal(k3, (cout,), jnp.float32)
            beta = 0.1 * jax.random.normal(k4, (cout,), jnp.float32)
            mean = 0.1 * jax.random.normal(k5, (cout,), jnp.float32)
            var = jnp.abs(jax.random.normal(k6, (cout,), jnp.float32)) + 0.5
            scale = gamma / jnp.sqrt(var + 1e-5)
            shift = beta - mean * scale
            lyr.update(act=True, scale=scale, shift=shift)
        else:
            lyr.update(act=False,
                       scale=jnp.ones((cout,), jnp.float32),
                       shift=jnp.zeros((cout,), jnp.float32))
        layers.append(lyr)
    return layers, ch


if __name__ == "__main__":
    channels = [4, 16, 24, 32]
    ratios = [2, 1, 2]
    kernel = 3

    key = jax.random.PRNGKey(0)
    key, pkey, xkey = jax.random.split(key, 3)
    layers, ch = build_conv_decoder_params(pkey, channels, ratios, kernel)

    B, T = 2, 8
    x = jax.random.normal(xkey, (B, ch[-1], T), jnp.float32)  # NCL, (2, 16, 8)

    ref = jax.block_until_ready(conv_decoder_reference(x, layers))

    # Exact f32-operand path: strict check against the lax.conv reference.
    packed_f32 = pack_decoder_params(layers, jnp.float32)
    out = jax.block_until_ready(conv_decoder_forward(x, packed_f32))
    assert out.shape == (B, ch[0], T * 4), out.shape
    assert bool(jnp.all(jnp.isfinite(out)))
    assert bool(jnp.allclose(out, ref, rtol=5e-4, atol=5e-4)), (
        float(jnp.max(jnp.abs(out - ref))))

    # bf16 MXU-operand fast path (full rate on v5e/v6e/v7x; elementwise stays
    # f32): looser tolerance vs the f32 reference.
    packed_bf16 = pack_decoder_params(layers, jnp.bfloat16)
    out_bf16 = jax.block_until_ready(conv_decoder_forward(x, packed_bf16))
    assert out_bf16.shape == (B, ch[0], T * 4), out_bf16.shape
    assert bool(jnp.all(jnp.isfinite(out_bf16)))
    assert bool(jnp.allclose(out_bf16, ref, rtol=5e-2, atol=5e-2)), (
        float(jnp.max(jnp.abs(out_bf16 - ref))))

    print("KERNEL_OK")
</pallas_src>

<mosaic_0001>
module attributes {stable_mosaic.version = 11 : i64} {
  func.func @_decoder_fused_kernel(%arg0: i32, %arg1: memref<2x16x8xf32, #tpu.memory_space<vmem>>, %arg2: memref<48x48xf32, #tpu.memory_space<vmem>>, %arg3: memref<3x48x1xf32, #tpu.memory_space<vmem>>, %arg4: memref<32x144xf32, #tpu.memory_space<vmem>>, %arg5: memref<3x32x1xf32, #tpu.memory_space<vmem>>, %arg6: memref<32x96xf32, #tpu.memory_space<vmem>>, %arg7: memref<3x32x1xf32, #tpu.memory_space<vmem>>, %arg8: memref<32x16xf32, #tpu.memory_space<vmem>>) attributes {dimension_semantics = [#tpu.dimension_semantics<arbitrary>], iteration_bounds = array<i64: 1>, scalar_prefetch = 0 : i64, scratch_operands = 0 : i64, tpu.core_type = #tpu.core_type<tc>, window_params = [{pipeline_mode = #tpu.pipeline_mode<synchronous>, transform_indices = @transform_0, window_bounds = array<i64: 2, 16, 8>}, {pipeline_mode = #tpu.pipeline_mode<synchronous>, transform_indices = @transform_1, window_bounds = array<i64: 48, 48>}, {pipeline_mode = #tpu.pipeline_mode<synchronous>, transform_indices = @transform_2, window_bounds = array<i64: 3, 48, 1>}, {pipeline_mode = #tpu.pipeline_mode<synchronous>, transform_indices = @transform_3, window_bounds = array<i64: 32, 144>}, {pipeline_mode = #tpu.pipeline_mode<synchronous>, transform_indices = @transform_4, window_bounds = array<i64: 3, 32, 1>}, {pipeline_mode = #tpu.pipeline_mode<synchronous>, transform_indices = @transform_5, window_bounds = array<i64: 32, 96>}, {pipeline_mode = #tpu.pipeline_mode<synchronous>, transform_indices = @transform_6, window_bounds = array<i64: 3, 32, 1>}, {pipeline_mode = #tpu.pipeline_mode<synchronous>, transform_indices = @transform_7, window_bounds = array<i64: 32, 16>}]} {
    %c0 = arith.constant 0 : index
    %c0_0 = arith.constant 0 : index
    %c0_1 = arith.constant 0 : index
    %0 = vector.load %arg1[%c0, %c0_0, %c0_1] : memref<2x16x8xf32, #tpu.memory_space<vmem>>, vector<1x16x8xf32>
    %1 = vector.shape_cast %0 : vector<1x16x8xf32> to vector<16x8xf32>
    %c1 = arith.constant 1 : index
    %c0_2 = arith.constant 0 : index
    %c0_3 = arith.constant 0 : index
    %2 = vector.load %arg1[%c1, %c0_2, %c0_3] : memref<2x16x8xf32, #tpu.memory_space<vmem>>, vector<1x16x8xf32>
    %3 = vector.shape_cast %2 : vector<1x16x8xf32> to vector<16x8xf32>
    %4 = tpu.concatenate %1, %3 in 1 : vector<16x8xf32>, vector<16x8xf32> -> vector<16x16xf32>
    %5 = tpu.iota {dimensions = array<i32: 1>} : vector<1x16xi32>
    %c7_i32 = arith.constant 7 : i32
    %6 = vector.broadcast %c7_i32 : i32 to vector<1x16xi32>
    %7 = arith.cmpi ne, %5, %6 : vector<1x16xi32>
    %c0_i32 = arith.constant 0 : i32
    %8 = vector.broadcast %c0_i32 : i32 to vector<1x16xi32>
    %9 = arith.cmpi ne, %5, %8 : vector<1x16xi32>
    %c15_i32 = arith.constant 15 : i32
    %10 = vector.broadcast %c15_i32 : i32 to vector<1x16xi32>
    %11 = arith.cmpi ne, %5, %10 : vector<1x16xi32>
    %12 = arith.andi %7, %11 : vector<1x16xi1>
    %c8_i32 = arith.constant 8 : i32
    %13 = vector.broadcast %c8_i32 : i32 to vector<1x16xi32>
    %14 = arith.cmpi ne, %5, %13 : vector<1x16xi32>
    %15 = arith.andi %9, %14 : vector<1x16xi1>
    %c0_4 = arith.constant 0 : index
    %c0_5 = arith.constant 0 : index
    %16 = vector.load %arg2[%c0_4, %c0_5] : memref<48x48xf32, #tpu.memory_space<vmem>>, vector<48x48xf32>
    %cst = arith.constant 0.000000e+00 : f32
    %17 = vector.broadcast %cst : f32 to vector<16x1xf32>
    %18 = vector.extract_strided_slice %4 {offsets = [0, 1], sizes = [16, 15], strides = [1, 1]} : vector<16x16xf32> to vector<16x15xf32>
    %19 = tpu.concatenate %18, %17 in 1 : vector<16x15xf32>, vector<16x1xf32> -> vector<16x16xf32>
    %20 = vector.extract_strided_slice %4 {offsets = [0, 0], sizes = [16, 15], strides = [1, 1]} : vector<16x16xf32> to vector<16x15xf32>
    %21 = tpu.concatenate %17, %20 in 1 : vector<16x1xf32>, vector<16x15xf32> -> vector<16x16xf32>
    %c0_i32_6 = arith.constant 0 : i32
    %22 = arith.sitofp %c0_i32_6 : i32 to f32
    %23 = vector.shape_cast %12 : vector<1x16xi1> to vector<1x16xi1>
    %24 = vector.broadcast %23 : vector<1x16xi1> to vector<16x16xi1>
    %25 = vector.broadcast %22 : f32 to vector<16x16xf32>
    %26 = arith.select %24, %19, %25 : vector<16x16xi1>, vector<16x16xf32>
    %c0_i32_7 = arith.constant 0 : i32
    %27 = arith.sitofp %c0_i32_7 : i32 to f32
    %28 = vector.shape_cast %15 : vector<1x16xi1> to vector<1x16xi1>
    %29 = vector.broadcast %28 : vector<1x16xi1> to vector<16x16xi1>
    %30 = vector.broadcast %27 : f32 to vector<16x16xf32>
    %31 = arith.select %29, %21, %30 : vector<16x16xi1>, vector<16x16xf32>
    %32 = tpu.concatenate %26, %4, %31 in 0 : vector<16x16xf32>, vector<16x16xf32>, vector<16x16xf32> -> vector<48x16xf32>
    %cst_8 = arith.constant dense<0.000000e+00> : vector<48x16xf32>
    %33 = tpu.matmul %16, %32, %cst_8 {dimension_numbers = #tpu.dot_dimension_numbers<[1], [0], [0], [1], [0, 0, 1, 1], [], []>} : vector<48x48xf32>, vector<48x16xf32>, vector<48x16xf32> -> vector<48x16xf32>
    %c0_9 = arith.constant 0 : index
    %c0_10 = arith.constant 0 : index
    %c0_11 = arith.constant 0 : index
    %34 = vector.load %arg3[%c0_9, %c0_10, %c0_11] : memref<3x48x1xf32, #tpu.memory_space<vmem>>, vector<1x48x1xf32>
    %35 = vector.shape_cast %34 : vector<1x48x1xf32> to vector<48x1xf32>
    %36 = vector.broadcast %35 : vector<48x1xf32> to vector<48x16xf32>
    %37 = arith.addf %33, %36 : vector<48x16xf32>
    %cst_12 = arith.constant 0.00999999977 : f32
    %38 = vector.broadcast %cst_12 : f32 to vector<48x16xf32>
    %39 = arith.mulf %38, %37 : vector<48x16xf32>
    %40 = arith.maximumf %37, %39 : vector<48x16xf32>
    %c1_13 = arith.constant 1 : index
    %c0_14 = arith.constant 0 : index
    %c0_15 = arith.constant 0 : index
    %41 = vector.load %arg3[%c1_13, %c0_14, %c0_15] : memref<3x48x1xf32, #tpu.memory_space<vmem>>, vector<1x48x1xf32>
    %42 = vector.shape_cast %41 : vector<1x48x1xf32> to vector<48x1xf32>
    %43 = vector.broadcast %42 : vector<48x1xf32> to vector<48x16xf32>
    %44 = arith.mulf %40, %43 : vector<48x16xf32>
    %c2 = arith.constant 2 : index
    %c0_16 = arith.constant 0 : index
    %c0_17 = arith.constant 0 : index
    %45 = vector.load %arg3[%c2, %c0_16, %c0_17] : memref<3x48x1xf32, #tpu.memory_space<vmem>>, vector<1x48x1xf32>
    %46 = vector.shape_cast %45 : vector<1x48x1xf32> to vector<48x1xf32>
    %47 = vector.broadcast %46 : vector<48x1xf32> to vector<48x16xf32>
    %48 = arith.addf %44, %47 : vector<48x16xf32>
    %c0_18 = arith.constant 0 : index
    %c0_19 = arith.constant 0 : index
    %49 = vector.load %arg4[%c0_18, %c0_19] : memref<32x144xf32, #tpu.memory_space<vmem>>, vector<32x144xf32>
    %cst_20 = arith.constant 0.000000e+00 : f32
    %50 = vector.broadcast %cst_20 : f32 to vector<48x1xf32>
    %51 = vector.extract_strided_slice %48 {offsets = [0, 1], sizes = [48, 15], strides = [1, 1]} : vector<48x16xf32> to vector<48x15xf32>
    %52 = tpu.concatenate %51, %50 in 1 : vector<48x15xf32>, vector<48x1xf32> -> vector<48x16xf32>
    %53 = vector.extract_strided_slice %48 {offsets = [0, 0], sizes = [48, 15], strides = [1, 1]} : vector<48x16xf32> to vector<48x15xf32>
    %54 = tpu.concatenate %50, %53 in 1 : vector<48x1xf32>, vector<48x15xf32> -> vector<48x16xf32>
    %c0_i32_21 = arith.constant 0 : i32
    %55 = arith.sitofp %c0_i32_21 : i32 to f32
    %56 = vector.shape_cast %12 : vector<1x16xi1> to vector<1x16xi1>
    %57 = vector.broadcast %56 : vector<1x16xi1> to vector<48x16xi1>
    %58 = vector.broadcast %55 : f32 to vector<48x16xf32>
    %59 = arith.select %57, %52, %58 : vector<48x16xi1>, vector<48x16xf32>
    %c0_i32_22 = arith.constant 0 : i32
    %60 = arith.sitofp %c0_i32_22 : i32 to f32
    %61 = vector.shape_cast %15 : vector<1x16xi1> to vector<1x16xi1>
    %62 = vector.broadcast %61 : vector<1x16xi1> to vector<48x16xi1>
    %63 = vector.broadcast %60 : f32 to vector<48x16xf32>
    %64 = arith.select %62, %54, %63 : vector<48x16xi1>, vector<48x16xf32>
    %65 = tpu.concatenate %59, %48, %64 in 0 : vector<48x16xf32>, vector<48x16xf32>, vector<48x16xf32> -> vector<144x16xf32>
    %cst_23 = arith.constant dense<0.000000e+00> : vector<32x16xf32>
    %66 = tpu.matmul %49, %65, %cst_23 {dimension_numbers = #tpu.dot_dimension_numbers<[1], [0], [0], [1], [0, 0, 1, 1], [], []>} : vector<32x144xf32>, vector<144x16xf32>, vector<32x16xf32> -> vector<32x16xf32>
    %c0_24 = arith.constant 0 : index
    %c0_25 = arith.constant 0 : index
    %c0_26 = arith.constant 0 : index
    %67 = vector.load %arg5[%c0_24, %c0_25, %c0_26] : memref<3x32x1xf32, #tpu.memory_space<vmem>>, vector<1x32x1xf32>
    %68 = vector.shape_cast %67 : vector<1x32x1xf32> to vector<32x1xf32>
    %69 = vector.broadcast %68 : vector<32x1xf32> to vector<32x16xf32>
    %70 = arith.addf %66, %69 : vector<32x16xf32>
    %cst_27 = arith.constant 0.00999999977 : f32
    %71 = vector.broadcast %cst_27 : f32 to vector<32x16xf32>
    %72 = arith.mulf %71, %70 : vector<32x16xf32>
    %73 = arith.maximumf %70, %72 : vector<32x16xf32>
    %c1_28 = arith.constant 1 : index
    %c0_29 = arith.constant 0 : index
    %c0_30 = arith.constant 0 : index
    %74 = vector.load %arg5[%c1_28, %c0_29, %c0_30] : memref<3x32x1xf32, #tpu.memory_space<vmem>>, vector<1x32x1xf32>
    %75 = vector.shape_cast %74 : vector<1x32x1xf32> to vector<32x1xf32>
    %76 = vector.broadcast %75 : vector<32x1xf32> to vector<32x16xf32>
    %77 = arith.mulf %73, %76 : vector<32x16xf32>
    %c2_31 = arith.constant 2 : index
    %c0_32 = arith.constant 0 : index
    %c0_33 = arith.constant 0 : index
    %78 = vector.load %arg5[%c2_31, %c0_32, %c0_33] : memref<3x32x1xf32, #tpu.memory_space<vmem>>, vector<1x32x1xf32>
    %79 = vector.shape_cast %78 : vector<1x32x1xf32> to vector<32x1xf32>
    %80 = vector.broadcast %79 : vector<32x1xf32> to vector<32x16xf32>
    %81 = arith.addf %77, %80 : vector<32x16xf32>
    %c0_34 = arith.constant 0 : index
    %c0_35 = arith.constant 0 : index
    %82 = vector.load %arg6[%c0_34, %c0_35] : memref<32x96xf32, #tpu.memory_space<vmem>>, vector<32x96xf32>
    %cst_36 = arith.constant 0.000000e+00 : f32
    %83 = vector.broadcast %cst_36 : f32 to vector<32x1xf32>
    %84 = vector.extract_strided_slice %81 {offsets = [0, 1], sizes = [32, 15], strides = [1, 1]} : vector<32x16xf32> to vector<32x15xf32>
    %85 = tpu.concatenate %84, %83 in 1 : vector<32x15xf32>, vector<32x1xf32> -> vector<32x16xf32>
    %86 = vector.extract_strided_slice %81 {offsets = [0, 0], sizes = [32, 15], strides = [1, 1]} : vector<32x16xf32> to vector<32x15xf32>
    %87 = tpu.concatenate %83, %86 in 1 : vector<32x1xf32>, vector<32x15xf32> -> vector<32x16xf32>
    %c0_i32_37 = arith.constant 0 : i32
    %88 = arith.sitofp %c0_i32_37 : i32 to f32
    %89 = vector.shape_cast %12 : vector<1x16xi1> to vector<1x16xi1>
    %90 = vector.broadcast %89 : vector<1x16xi1> to vector<32x16xi1>
    %91 = vector.broadcast %88 : f32 to vector<32x16xf32>
    %92 = arith.select %90, %85, %91 : vector<32x16xi1>, vector<32x16xf32>
    %c0_i32_38 = arith.constant 0 : i32
    %93 = arith.sitofp %c0_i32_38 : i32 to f32
    %94 = vector.shape_cast %15 : vector<1x16xi1> to vector<1x16xi1>
    %95 = vector.broadcast %94 : vector<1x16xi1> to vector<32x16xi1>
    %96 = vector.broadcast %93 : f32 to vector<32x16xf32>
    %97 = arith.select %95, %87, %96 : vector<32x16xi1>, vector<32x16xf32>
    %98 = tpu.concatenate %92, %81, %97 in 0 : vector<32x16xf32>, vector<32x16xf32>, vector<32x16xf32> -> vector<96x16xf32>
    %cst_39 = arith.constant dense<0.000000e+00> : vector<32x16xf32>
    %99 = tpu.matmul %82, %98, %cst_39 {dimension_numbers = #tpu.dot_dimension_numbers<[1], [0], [0], [1], [0, 0, 1, 1], [], []>} : vector<32x96xf32>, vector<96x16xf32>, vector<32x16xf32> -> vector<32x16xf32>
    %c0_40 = arith.constant 0 : index
    %c0_41 = arith.constant 0 : index
    %c0_42 = arith.constant 0 : index
    %100 = vector.load %arg7[%c0_40, %c0_41, %c0_42] : memref<3x32x1xf32, #tpu.memory_space<vmem>>, vector<1x32x1xf32>
    %101 = vector.shape_cast %100 : vector<1x32x1xf32> to vector<32x1xf32>
    %102 = vector.broadcast %101 : vector<32x1xf32> to vector<32x16xf32>
    %103 = arith.addf %99, %102 : vector<32x16xf32>
    %c0_43 = arith.constant 0 : index
    %c0_44 = arith.constant 0 : index
    %104 = vector.load %arg8[%c0_43, %c0_44] : memref<32x16xf32, #tpu.memory_space<vmem>>, vector<32x16xf32>
    tpu.vector_store %arg8[%c0_43, %c0_44], %103 {strides = array<i32>} : memref<32x16xf32, #tpu.memory_space<vmem>>, vector<32x16xf32>,
    return
  }
  func.func @transform_0(%arg0: i32) -> (i32, i32, i32) {
    %c0_i32 = arith.constant 0 : i32
    %c0_i32_0 = arith.constant 0 : i32
    %c0_i32_1 = arith.constant 0 : i32
    %c0_i32_2 = arith.constant 0 : i32
    return %c0_i32, %c0_i32_0, %c0_i32_1 : i32, i32, i32
  }
  func.func @transform_1(%arg0: i32) -> (i32, i32) {
    %c0_i32 = arith.constant 0 : i32
    %c0_i32_0 = arith.constant 0 : i32
    %c0_i32_1 = arith.constant 0 : i32
    return %c0_i32, %c0_i32_0 : i32, i32
  }
  func.func @transform_2(%arg0: i32) -> (i32, i32, i32) {
    %c0_i32 = arith.constant 0 : i32
    %c0_i32_0 = arith.constant 0 : i32
    %c0_i32_1 = arith.constant 0 : i32
    %c0_i32_2 = arith.constant 0 : i32
    return %c0_i32, %c0_i32_0, %c0_i32_1 : i32, i32, i32
  }
  func.func @transform_3(%arg0: i32) -> (i32, i32) {
    %c0_i32 = arith.constant 0 : i32
    %c0_i32_0 = arith.constant 0 : i32
    %c0_i32_1 = arith.constant 0 : i32
    return %c0_i32, %c0_i32_0 : i32, i32
  }
  func.func @transform_4(%arg0: i32) -> (i32, i32, i32) {
    %c0_i32 = arith.constant 0 : i32
    %c0_i32_0 = arith.constant 0 : i32
    %c0_i32_1 = arith.constant 0 : i32
    %c0_i32_2 = arith.constant 0 : i32
    return %c0_i32, %c0_i32_0, %c0_i32_1 : i32, i32, i32
  }
  func.func @transform_5(%arg0: i32) -> (i32, i32) {
    %c0_i32 = arith.constant 0 : i32
    %c0_i32_0 = arith.constant 0 : i32
    %c0_i32_1 = arith.constant 0 : i32
    return %c0_i32, %c0_i32_0 : i32, i32
  }
  func.func @transform_6(%arg0: i32) -> (i32, i32, i32) {
    %c0_i32 = arith.constant 0 : i32
    %c0_i32_0 = arith.constant 0 : i32
    %c0_i32_1 = arith.constant 0 : i32
    %c0_i32_2 = arith.constant 0 : i32
    return %c0_i32, %c0_i32_0, %c0_i32_1 : i32, i32, i32
  }
  func.func @transform_7(%arg0: i32) -> (i32, i32) {
    %c0_i32 = arith.constant 0 : i32
    %c0_i32_0 = arith.constant 0 : i32
    %c0_i32_1 = arith.constant 0 : i32
    return %c0_i32, %c0_i32_0 : i32, i32
  }
}

</mosaic_0001>

<llo_original>
// kernel: tpu_custom_call.1
$region0: #{tpu_custom_call.1}
  #allocation0 [shape = 'u32[]', space=smem, size = 0x4, offset = 0x4, fixed_abs, tag = 'smem constant byte address 0x4 - core index']
  #allocation1 [shape = 'u32[144,128]{1,0:T(1,128)}', space=vmem, size = 0x12000, scoped, tag = 'internal scratch']
  %s0 = inlined_call_operand.vmem [shape: f32[2,16,8], index: 0, kind: input, shape index: {}]
  %s1 = inlined_call_operand.vmem [shape: f32[48,48], index: 1, kind: input, shape index: {}]
  %s2 = inlined_call_operand.vmem [shape: f32[3,48,1], index: 2, kind: input, shape index: {}]
  %s3 = inlined_call_operand.vmem [shape: f32[32,144], index: 3, kind: input, shape index: {}]
  %s4 = inlined_call_operand.vmem [shape: f32[3,32,1], index: 4, kind: input, shape index: {}]
  %s5 = inlined_call_operand.vmem [shape: f32[32,96], index: 5, kind: input, shape index: {}]
  %s6 = inlined_call_operand.vmem [shape: f32[3,32,1], index: 6, kind: input, shape index: {}]
  %s7 = inlined_call_operand.vmem [shape: f32[32,16], index: 7, kind: output, shape index: {}]
  %s8 = sld [smem:[#allocation0]]
  $region38: #{tpu_custom_call.1} parent=0
    _
  %s10 = ssub.s32 1, %s8
  %s11 = scalar_select 0, %s10, %s8
  // Predicated region
  $region2: #{tpu_custom_call.1} parent=0 // pred_check
    _
  $region3: #{tpu_custom_call.1} parent=0 // pred_check_branch
    %13 = sbr.rel (0) target = $region5
  $region4: #{tpu_custom_call.1} parent=0 // pred_region
    _
  $region5: #{tpu_custom_call.1} parent=0 // pred_fallthru
    _
  // Predicated region
  $region6: #{tpu_custom_call.1} parent=0 // pred_check
    _
  $region7: #{tpu_custom_call.1} parent=0 // pred_check_branch
    %15 = sbr.rel (0) target = $region9
  $region8: #{tpu_custom_call.1} parent=0 // pred_region
    _
  $region9: #{tpu_custom_call.1} parent=0 // pred_fallthru
    _
  // Predicated region
  $region10: #{tpu_custom_call.1} parent=0 // pred_check
    _
  $region11: #{tpu_custom_call.1} parent=0 // pred_check_branch
    %17 = sbr.rel (0) target = $region13
  $region12: #{tpu_custom_call.1} parent=0 // pred_region
    _
  $region13: #{tpu_custom_call.1} parent=0 // pred_fallthru
    _
  // Predicated region
  $region14: #{tpu_custom_call.1} parent=0 // pred_check
    _
  $region15: #{tpu_custom_call.1} parent=0 // pred_check_branch
    %19 = sbr.rel (0) target = $region17
  $region16: #{tpu_custom_call.1} parent=0 // pred_region
    _
  $region17: #{tpu_custom_call.1} parent=0 // pred_fallthru
    _
  // Predicated region
  $region18: #{tpu_custom_call.1} parent=0 // pred_check
    _
  $region19: #{tpu_custom_call.1} parent=0 // pred_check_branch
    %21 = sbr.rel (0) target = $region21
  $region20: #{tpu_custom_call.1} parent=0 // pred_region
    _
  $region21: #{tpu_custom_call.1} parent=0 // pred_fallthru
    _
  // Predicated region
  $region22: #{tpu_custom_call.1} parent=0 // pred_check
    _
  $region23: #{tpu_custom_call.1} parent=0 // pred_check_branch
    %23 = sbr.rel (0) target = $region25
  $region24: #{tpu_custom_call.1} parent=0 // pred_region
    _
  $region25: #{tpu_custom_call.1} parent=0 // pred_fallthru
    _
  // Predicated region
  $region26: #{tpu_custom_call.1} parent=0 // pred_check
    _
  $region27: #{tpu_custom_call.1} parent=0 // pred_check_branch
    %25 = sbr.rel (0) target = $region29
  $region28: #{tpu_custom_call.1} parent=0 // pred_region
    _
  $region29: #{tpu_custom_call.1} parent=0 // pred_fallthru
    _
  %v26 = vld [vmem:[%s0] sm:$0xff]
  %v27 = vld [vmem:[%s0 + $0x8] sm:$0xff]
  %s28 = scalar_lea.vmem %s0, 16
  %v29 = vld [vmem:[%s28] sm:$0xff]
  %v30 = vld [vmem:[%s28 + $0x8] sm:$0xff]
  %33 = vrot.lane.b32.xlu0 %v29, 8
  %v34 = vpop.permute.xlu0 %33
  %35 = vrot.lane.b32.xlu0 %v30, 8
  %v36 = vpop.permute.xlu0 %35
  %vm39 = vcmask 64512
  %v40 = vsel %vm39, %v26, %v34
  %v41 = vsel %vm39, %v27, %v36
  %v42 = vlaneseq
  %v43 = vand.u32 %v42, 127
  %vm44 = vcmp.ne.s32.totalorder %v43, 7
  %vm45 = vcmp.ne.s32.totalorder %v43, 0
  %vm46 = vcmp.ne.s32.totalorder %v43, 15
  %vm47 = vmand %vm44, %vm46
  %vm48 = vcmp.ne.s32.totalorder %v43, 8
  %vm49 = vmand %vm45, %vm48
  %v50 = vld [vmem:[%s1] sm:$0xff]
  %v51 = vld [vmem:[%s1 + $0x8] sm:$0xff]
  %v52 = vld [vmem:[%s1 + $0x10] sm:$0xff]
  %v53 = vld [vmem:[%s1 + $0x18] sm:$0xff]
  %v54 = vld [vmem:[%s1 + $0x20] sm:$0xff]
  %v55 = vld [vmem:[%s1 + $0x28] sm:$0xff]
  %58 = vrot.lane.b32.xlu0 %v40, 127
  %v59 = vpop.permute.xlu0 %58
  %60 = vrot.lane.b32.xlu0 %v41, 127
  %v61 = vpop.permute.xlu0 %60
  %vm64 = vcmask 121856
  %v65 = vsel %vm64, %v59, 0.0
  %v66 = vsel %vm64, %v61, 0.0
  %67 = vrot.lane.b32.xlu0 %v40, 1
  %v68 = vpop.permute.xlu0 %67
  %69 = vrot.lane.b32.xlu0 %v41, 1
  %v70 = vpop.permute.xlu0 %69
  %vm73 = vcmask 7168
  %v74 = vsel %vm73, 0.0, %v68
  %v75 = vsel %vm73, 0.0, %v70
  %v76 = vsel %vm47, 1, 0
  %vm77 = vcmp.eq.s32.totalorder %v76, 1
  %v78 = vsel %vm77, %v65, 0.0
  %v79 = vsel %vm77, %v66, 0.0
  %v80 = vsel %vm49, 1, 0
  %vm81 = vcmp.eq.s32.totalorder %v80, 1
  %v82 = vsel %vm81, %v74, 0.0
  %v83 = vsel %vm81, %v75, 0.0
  %v84 = vld [vmem:[%s2] sm:$0xff]
  %v85 = vld [vmem:[%s2 + $0x8] sm:$0xff]
  %v86 = vld [vmem:[%s2 + $0x10] sm:$0xff]
  %v87 = vld [vmem:[%s2 + $0x18] sm:$0xff]
  %v88 = vld [vmem:[%s2 + $0x20] sm:$0xff]
  %v89 = vld [vmem:[%s2 + $0x28] sm:$0xff]
  %91 = vset.pattern.permute.xlu0 0
  %92 = vperm.xlu0 %91, %v84
  %v93 = vpop.permute.xlu0 %92
  %96 = vset.pattern.permute.xlu0 0
  %97 = vperm.xlu0 %96, %v85
  %v98 = vpop.permute.xlu0 %97
  %101 = vset.pattern.permute.xlu0 0
  %102 = vperm.xlu0 %101, %v86
  %v103 = vpop.permute.xlu0 %102
  %106 = vset.pattern.permute.xlu0 0
  %107 = vperm.xlu0 %106, %v87
  %v108 = vpop.permute.xlu0 %107
  %111 = vset.pattern.permute.xlu0 0
  %112 = vperm.xlu0 %111, %v88
  %v113 = vpop.permute.xlu0 %112
  %116 = vset.pattern.permute.xlu0 0
  %117 = vperm.xlu0 %116, %v89
  %v118 = vpop.permute.xlu0 %117
  %vm120 = vcmask 392192
  %v122 = vsel %vm120, %v50, 0
  %v125 = vsel %vm120, %v51, 0
  %v128 = vsel %vm120, %v52, 0
  %v131 = vsel %vm120, %v53, 0
  %v134 = vsel %vm120, %v54, 0
  %v137 = vsel %vm120, %v55, 0
  %139 = vmatprep.subr.mxu0 0.0
  %140 = vmatpush1.msra.mxu0 %v78
  %141 = vmatprep.subr.mxu0 0.0
  %142 = vmatpush1.msra.mxu0 %v79
  %143 = vmatprep.subr.mxu0 0.0
  %144 = vmatpush1.msra.mxu0 %v40
  %145 = vmatprep.subr.mxu0 0.0
  %146 = vmatpush1.msra.mxu0 %v41
  %147 = vmatprep.subr.mxu0 0.0
  %148 = vmatpush1.msra.mxu0 %v82
  %149 = vmatprep.subr.mxu0 0.0
  %150 = vmatpush1.msra.mxu0 %v83
  %151 = vmatprep.subr.mxu0 0.0
  %152 = vmatpush1.msra.mxu0 0.0
  %153 = vmatprep.subr.mxu0 0.0
  %154 = vmatpush1.msra.mxu0 0.0
  %155 = vmatprep.subr.mxu0 0.0
  %156 = vmatpush1.msra.mxu0 0.0
  %157 = vmatprep.subr.mxu0 0.0
  %158 = vmatpush1.msra.mxu0 0.0
  %159 = vmatprep.subr.mxu0 0.0
  %160 = vmatpush1.msra.mxu0 0.0
  %161 = vmatprep.subr.mxu0 0.0
  %162 = vmatpush1.msra.mxu0 0.0
  %163 = vmatprep.subr.mxu0 0.0
  %164 = vmatpush1.msra.mxu0 0.0
  %165 = vmatprep.subr.mxu0 0.0
  %166 = vmatpush1.msra.mxu0 0.0
  %167 = vmatprep.subr.mxu0 0.0
  %168 = vmatpush1.msra.mxu0 0.0
  %169 = vmatprep.subr.mxu0 0.0
  %170 = vmatpush1.msra.mxu0 0.0
  %171 = vmatprep.subr.mxu0 0.0
  %172 = vmatpush1.msra.mxu0 0.0
  %173 = vmatprep.subr.mxu0 0.0
  %174 = vmatpush1.msra.mxu0 0.0
  %175 = vmatprep.subr.mxu0 0.0
  %176 = vmatpush1.msra.mxu0 0.0
  %177 = vmatprep.subr.mxu0 0.0
  %178 = vmatpush1.msra.mxu0 0.0
  %179 = vmatprep.subr.mxu0 0.0
  %180 = vmatpush1.msra.mxu0 0.0
  %181 = vmatprep.subr.mxu0 0.0
  %182 = vmatpush1.msra.mxu0 0.0
  %183 = vmatprep.subr.mxu0 0.0
  %184 = vmatpush1.msra.mxu0 0.0
  %185 = vmatprep.subr.mxu0 0.0
  %186 = vmatpush1.msra.mxu0 0.0
  %187 = vmatprep.subr.mxu0 0.0
  %188 = vmatpush1.msra.mxu0 0.0
  %189 = vmatprep.subr.mxu0 0.0
  %190 = vmatpush1.msra.mxu0 0.0
  %191 = vmatprep.subr.mxu0 0.0
  %192 = vmatpush1.msra.mxu0 0.0
  %193 = vmatprep.subr.mxu0 0.0
  %194 = vmatpush1.msra.mxu0 0.0
  %195 = vmatprep.subr.mxu0 0.0
  %196 = vmatpush1.msra.mxu0 0.0
  %197 = vmatprep.subr.mxu0 0.0
  %198 = vmatpush1.msra.mxu0 0.0
  %199 = vmatprep.subr.mxu0 0.0
  %200 = vmatpush1.msra.mxu0 0.0
  %201 = vmatprep.subr.mxu0 0.0
  %202 = vmatpush1.msra.mxu0 0.0
  %203 = vmatprep.mubr.f32.mxu0 0.0
  %204 = vmatmul.mubr.f32.gmra.mrb[0].mxu0 %v122
  %v205 = vpop.f32.mrb[0].mxu0
  %v206 = vadd.f32 %v93, %v205
  %v207 = vpop.f32.mrb[0].mxu0
  %208 = vmatprep.mubr.f32.mxu0 0.0
  %209 = vmatmul.mubr.f32.gmra.mrb[0].mxu0 %v125
  %v210 = vpop.f32.mrb[0].mxu0
  %v211 = vadd.f32 %v98, %v210
  %v212 = vpop.f32.mrb[0].mxu0
  %213 = vmatprep.mubr.f32.mxu0 0.0
  %214 = vmatmul.mubr.f32.gmra.mrb[0].mxu0 %v128
  %v215 = vpop.f32.mrb[0].mxu0
  %v216 = vadd.f32 %v103, %v215
  %v217 = vpop.f32.mrb[0].mxu0
  %218 = vmatprep.mubr.f32.mxu0 0.0
  %219 = vmatmul.mubr.f32.gmra.mrb[0].mxu0 %v131
  %v220 = vpop.f32.mrb[0].mxu0
  %v221 = vadd.f32 %v108, %v220
  %v222 = vpop.f32.mrb[0].mxu0
  %223 = vmatprep.mubr.f32.mxu0 0.0
  %224 = vmatmul.mubr.f32.gmra.mrb[0].mxu0 %v134
  %v225 = vpop.f32.mrb[0].mxu0
  %v226 = vadd.f32 %v113, %v225
  %v227 = vpop.f32.mrb[0].mxu0
  %228 = vmatprep.mubr.f32.mxu0 0.0
  %229 = vmatmul.mubr.f32.gmra.mrb[0].mxu0 %v137
  %v230 = vpop.f32.mrb[0].mxu0
  %v231 = vadd.f32 %v118, %v230
  %v232 = vpop.f32.mrb[0].mxu0
  %233 = vdwg.mxu0
  %v234 = vmul.f32 %v206, 0.01
  %v235 = vmul.f32 %v211, 0.01
  %v236 = vmul.f32 %v216, 0.01
  %v237 = vmul.f32 %v221, 0.01
  %v238 = vmul.f32 %v226, 0.01
  %v239 = vmul.f32 %v231, 0.01
  %v240 = vmax.f32 %v206, %v234
  %v241 = vmax.f32 %v211, %v235
  %v242 = vmax.f32 %v216, %v236
  %v243 = vmax.f32 %v221, %v237
  %v244 = vmax.f32 %v226, %v238
  %v245 = vmax.f32 %v231, %v239
  %s246 = scalar_lea.vmem %s2, 48
  %v247 = vld [vmem:[%s246] sm:$0xff]
  %v248 = vld [vmem:[%s246 + $0x8] sm:$0xff]
  %v249 = vld [vmem:[%s246 + $0x10] sm:$0xff]
  %v250 = vld [vmem:[%s246 + $0x18] sm:$0xff]
  %v251 = vld [vmem:[%s246 + $0x20] sm:$0xff]
  %v252 = vld [vmem:[%s246 + $0x28] sm:$0xff]
  %254 = vset.pattern.permute.xlu0 0
  %255 = vperm.xlu0 %254, %v247
  %v256 = vpop.permute.xlu0 %255
  %259 = vset.pattern.permute.xlu0 0
  %260 = vperm.xlu0 %259, %v248
  %v261 = vpop.permute.xlu0 %260
  %264 = vset.pattern.permute.xlu0 0
  %265 = vperm.xlu0 %264, %v249
  %v266 = vpop.permute.xlu0 %265
  %269 = vset.pattern.permute.xlu0 0
  %270 = vperm.xlu0 %269, %v250
  %v271 = vpop.permute.xlu0 %270
  %274 = vset.pattern.permute.xlu0 0
  %275 = vperm.xlu0 %274, %v251
  %v276 = vpop.permute.xlu0 %275
  %279 = vset.pattern.permute.xlu0 0
  %280 = vperm.xlu0 %279, %v252
  %v281 = vpop.permute.xlu0 %280
  %v283 = vmul.f32 %v240, %v256
  %v284 = vmul.f32 %v241, %v261
  %v285 = vmul.f32 %v242, %v266
  %v286 = vmul.f32 %v243, %v271
  %v287 = vmul.f32 %v244, %v276
  %v288 = vmul.f32 %v245, %v281
  %s289 = scalar_lea.vmem %s2, 96
  %v290 = vld [vmem:[%s289] sm:$0xff]
  %v291 = vld [vmem:[%s289 + $0x8] sm:$0xff]
  %v292 = vld [vmem:[%s289 + $0x10] sm:$0xff]
  %v293 = vld [vmem:[%s289 + $0x18] sm:$0xff]
  %v294 = vld [vmem:[%s289 + $0x20] sm:$0xff]
  %v295 = vld [vmem:[%s289 + $0x28] sm:$0xff]
  %297 = vset.pattern.permute.xlu0 0
  %298 = vperm.xlu0 %297, %v290
  %v299 = vpop.permute.xlu0 %298
  %302 = vset.pattern.permute.xlu0 0
  %303 = vperm.xlu0 %302, %v291
  %v304 = vpop.permute.xlu0 %303
  %307 = vset.pattern.permute.xlu0 0
  %308 = vperm.xlu0 %307, %v292
  %v309 = vpop.permute.xlu0 %308
  %312 = vset.pattern.permute.xlu0 0
  %313 = vperm.xlu0 %312, %v293
  %v314 = vpop.permute.xlu0 %313
  %317 = vset.pattern.permute.xlu0 0
  %318 = vperm.xlu0 %317, %v294
  %v319 = vpop.permute.xlu0 %318
  %322 = vset.pattern.permute.xlu0 0
  %323 = vperm.xlu0 %322, %v295
  %v324 = vpop.permute.xlu0 %323
  %v326 = vadd.f32 %v283, %v299
  %v327 = vadd.f32 %v284, %v304
  %v328 = vadd.f32 %v285, %v309
  %v329 = vadd.f32 %v286, %v314
  %v330 = vadd.f32 %v287, %v319
  %v331 = vadd.f32 %v288, %v324
  %v332 = vld [vmem:[%s3] sm:$0xff]
  %v333 = vld [vmem:[%s3 + $0x8] sm:$0xff]
  %v334 = vld [vmem:[%s3 + $0x10] sm:$0xff]
  %v335 = vld [vmem:[%s3 + $0x18] sm:$0xff]
  %v336 = vld [vmem:[%s3 + $0x20] sm:$0xff]
  %v337 = vld [vmem:[%s3 + $0x28] sm:$0xff]
  %v338 = vld [vmem:[%s3 + $0x30] sm:$0xff]
  %v339 = vld [vmem:[%s3 + $0x38] sm:$0xff]
  %346 = vrot.lane.b32.xlu0 %v326, 127
  %v347 = vpop.permute.xlu0 %346
  %348 = vrot.lane.b32.xlu0 %v327, 127
  %v349 = vpop.permute.xlu0 %348
  %350 = vrot.lane.b32.xlu0 %v328, 127
  %v351 = vpop.permute.xlu0 %350
  %352 = vrot.lane.b32.xlu0 %v329, 127
  %v353 = vpop.permute.xlu0 %352
  %354 = vrot.lane.b32.xlu0 %v330, 127
  %v355 = vpop.permute.xlu0 %354
  %356 = vrot.lane.b32.xlu0 %v331, 127
  %v357 = vpop.permute.xlu0 %356
  %v364 = vsel %vm64, %v347, 0.0
  %v365 = vsel %vm64, %v349, 0.0
  %v366 = vsel %vm64, %v351, 0.0
  %v367 = vsel %vm64, %v353, 0.0
  %v368 = vsel %vm64, %v355, 0.0
  %v369 = vsel %vm64, %v357, 0.0
  %370 = vrot.lane.b32.xlu0 %v326, 1
  %v371 = vpop.permute.xlu0 %370
  %372 = vrot.lane.b32.xlu0 %v327, 1
  %v373 = vpop.permute.xlu0 %372
  %374 = vrot.lane.b32.xlu0 %v328, 1
  %v375 = vpop.permute.xlu0 %374
  %376 = vrot.lane.b32.xlu0 %v329, 1
  %v377 = vpop.permute.xlu0 %376
  %378 = vrot.lane.b32.xlu0 %v330, 1
  %v379 = vpop.permute.xlu0 %378
  %380 = vrot.lane.b32.xlu0 %v331, 1
  %v381 = vpop.permute.xlu0 %380
  %v388 = vsel %vm73, 0.0, %v371
  %v389 = vsel %vm73, 0.0, %v373
  %v390 = vsel %vm73, 0.0, %v375
  %v391 = vsel %vm73, 0.0, %v377
  %v392 = vsel %vm73, 0.0, %v379
  %v393 = vsel %vm73, 0.0, %v381
  %v394 = vsel %vm77, %v364, 0.0
  %v395 = vsel %vm77, %v365, 0.0
  %v396 = vsel %vm77, %v366, 0.0
  %v397 = vsel %vm77, %v367, 0.0
  %v398 = vsel %vm77, %v368, 0.0
  %v399 = vsel %vm77, %v369, 0.0
  %v400 = vsel %vm81, %v388, 0.0
  %v401 = vsel %vm81, %v389, 0.0
  %v402 = vsel %vm81, %v390, 0.0
  %v403 = vsel %vm81, %v391, 0.0
  %v404 = vsel %vm81, %v392, 0.0
  %v405 = vsel %vm81, %v393, 0.0
  %v406 = vld [vmem:[%s4] sm:$0xff]
  %v407 = vld [vmem:[%s4 + $0x8] sm:$0xff]
  %v408 = vld [vmem:[%s4 + $0x10] sm:$0xff]
  %v409 = vld [vmem:[%s4 + $0x18] sm:$0xff]
  %411 = vset.pattern.permute.xlu0 0
  %412 = vperm.xlu0 %411, %v406
  %v413 = vpop.permute.xlu0 %412
  %416 = vset.pattern.permute.xlu0 0
  %417 = vperm.xlu0 %416, %v407
  %v418 = vpop.permute.xlu0 %417
  %421 = vset.pattern.permute.xlu0 0
  %422 = vperm.xlu0 %421, %v408
  %v423 = vpop.permute.xlu0 %422
  %426 = vset.pattern.permute.xlu0 0
  %427 = vperm.xlu0 %426, %v409
  %v428 = vpop.permute.xlu0 %427
  %vm430 = vcmask 130048
  %v432 = vsel %vm430, %v333, 0
  %v435 = vsel %vm430, %v335, 0
  %v438 = vsel %vm430, %v337, 0
  %v441 = vsel %vm430, %v339, 0
  %443 = vmatprep.subr.mxu0 0.0
  %444 = vmatpush1.msra.mxu0 %v394
  %445 = vmatprep.subr.mxu0 0.0
  %446 = vmatpush1.msra.mxu0 %v395
  %447 = vmatprep.subr.mxu0 0.0
  %448 = vmatpush1.msra.mxu0 %v396
  %449 = vmatprep.subr.mxu0 0.0
  %450 = vmatpush1.msra.mxu0 %v397
  %451 = vmatprep.subr.mxu0 0.0
  %452 = vmatpush1.msra.mxu0 %v398
  %453 = vmatprep.subr.mxu0 0.0
  %454 = vmatpush1.msra.mxu0 %v399
  %455 = vmatprep.subr.mxu0 0.0
  %456 = vmatpush1.msra.mxu0 %v326
  %457 = vmatprep.subr.mxu0 0.0
  %458 = vmatpush1.msra.mxu0 %v327
  %459 = vmatprep.subr.mxu0 0.0
  %460 = vmatpush1.msra.mxu0 %v328
  %461 = vmatprep.subr.mxu0 0.0
  %462 = vmatpush1.msra.mxu0 %v329
  %463 = vmatprep.subr.mxu0 0.0
  %464 = vmatpush1.msra.mxu0 %v330
  %465 = vmatprep.subr.mxu0 0.0
  %466 = vmatpush1.msra.mxu0 %v331
  %467 = vmatprep.subr.mxu0 0.0
  %468 = vmatpush1.msra.mxu0 %v400
  %469 = vmatprep.subr.mxu0 0.0
  %470 = vmatpush1.msra.mxu0 %v401
  %471 = vmatprep.subr.mxu0 0.0
  %472 = vmatpush1.msra.mxu0 %v402
  %473 = vmatprep.subr.mxu0 0.0
  %474 = vmatpush1.msra.mxu0 %v403
  %475 = vmatprep.subr.mxu0 0.0
  %476 = vmatpush1.msra.mxu0 %v404
  %477 = vmatprep.subr.mxu0 0.0
  %478 = vmatpush1.msra.mxu0 %v405
  %479 = vmatprep.subr.mxu0 0.0
  %480 = vmatpush1.msra.mxu0 0.0
  %481 = vmatprep.subr.mxu0 0.0
  %482 = vmatpush1.msra.mxu0 0.0
  %483 = vmatprep.subr.mxu0 0.0
  %484 = vmatpush1.msra.mxu0 0.0
  %485 = vmatprep.subr.mxu0 0.0
  %486 = vmatpush1.msra.mxu0 0.0
  %487 = vmatprep.subr.mxu0 0.0
  %488 = vmatpush1.msra.mxu0 0.0
  %489 = vmatprep.subr.mxu0 0.0
  %490 = vmatpush1.msra.mxu0 0.0
  %491 = vmatprep.subr.mxu0 0.0
  %492 = vmatpush1.msra.mxu0 0.0
  %493 = vmatprep.subr.mxu0 0.0
  %494 = vmatpush1.msra.mxu0 0.0
  %495 = vmatprep.subr.mxu0 0.0
  %496 = vmatpush1.msra.mxu0 0.0
  %497 = vmatprep.subr.mxu0 0.0
  %498 = vmatpush1.msra.mxu0 0.0
  %499 = vmatprep.subr.mxu0 0.0
  %500 = vmatpush1.msra.mxu0 0.0
  %501 = vmatprep.subr.mxu0 0.0
  %502 = vmatpush1.msra.mxu0 0.0
  %503 = vmatprep.subr.mxu0 0.0
  %504 = vmatpush1.msra.mxu0 0.0
  %505 = vmatprep.subr.mxu0 0.0
  %506 = vmatpush1.msra.mxu0 0.0
  %507 = vmatprep.mubr.f32.mxu0 %v432
  %508 = vmatmul.mubr.f32.gmra.mrb[0].mxu0 %v332
  %v509 = vpop.f32.mrb[0].mxu0
  %v510 = vadd.f32 %v413, %v509
  %v511 = vpop.f32.mrb[0].mxu0
  %512 = vmatprep.mubr.f32.mxu0 %v435
  %513 = vmatmul.mubr.f32.gmra.mrb[0].mxu0 %v334
  %v514 = vpop.f32.mrb[0].mxu0
  %v515 = vadd.f32 %v418, %v514
  %v516 = vpop.f32.mrb[0].mxu0
  %517 = vmatprep.mubr.f32.mxu0 %v438
  %518 = vmatmul.mubr.f32.gmra.mrb[0].mxu0 %v336
  %v519 = vpop.f32.mrb[0].mxu0
  %v520 = vadd.f32 %v423, %v519
  %v521 = vpop.f32.mrb[0].mxu0
  %522 = vmatprep.mubr.f32.mxu0 %v441
  %523 = vmatmul.mubr.f32.gmra.mrb[0].mxu0 %v338
  %v524 = vpop.f32.mrb[0].mxu0
  %v525 = vadd.f32 %v428, %v524
  %v526 = vpop.f32.mrb[0].mxu0
  %527 = vdwg.mxu0
  %v528 = vmul.f32 %v510, 0.01
  %v529 = vmul.f32 %v515, 0.01
  %v530 = vmul.f32 %v520, 0.01
  %v531 = vmul.f32 %v525, 0.01
  %v532 = vmax.f32 %v510, %v528
  %v533 = vmax.f32 %v515, %v529
  %v534 = vmax.f32 %v520, %v530
  %v535 = vmax.f32 %v525, %v531
  %s536 = scalar_lea.vmem %s4, 32
  %v537 = vld [vmem:[%s536] sm:$0xff]
  %v538 = vld [vmem:[%s536 + $0x8] sm:$0xff]
  %v539 = vld [vmem:[%s536 + $0x10] sm:$0xff]
  %v540 = vld [vmem:[%s536 + $0x18] sm:$0xff]
  %542 = vset.pattern.permute.xlu0 0
  %543 = vperm.xlu0 %542, %v537
  %v544 = vpop.permute.xlu0 %543
  %547 = vset.pattern.permute.xlu0 0
  %548 = vperm.xlu0 %547, %v538
  %v549 = vpop.permute.xlu0 %548
  %552 = vset.pattern.permute.xlu0 0
  %553 = vperm.xlu0 %552, %v539
  %v554 = vpop.permute.xlu0 %553
  %557 = vset.pattern.permute.xlu0 0
  %558 = vperm.xlu0 %557, %v540
  %v559 = vpop.permute.xlu0 %558
  %v561 = vmul.f32 %v532, %v544
  %v562 = vmul.f32 %v533, %v549
  %v563 = vmul.f32 %v534, %v554
  %v564 = vmul.f32 %v535, %v559
  %s565 = scalar_lea.vmem %s4, 64
  %v566 = vld [vmem:[%s565] sm:$0xff]
  %v567 = vld [vmem:[%s565 + $0x8] sm:$0xff]
  %v568 = vld [vmem:[%s565 + $0x10] sm:$0xff]
  %v569 = vld [vmem:[%s565 + $0x18] sm:$0xff]
  %571 = vset.pattern.permute.xlu0 0
  %572 = vperm.xlu0 %571, %v566
  %v573 = vpop.permute.xlu0 %572
  %576 = vset.pattern.permute.xlu0 0
  %577 = vperm.xlu0 %576, %v567
  %v578 = vpop.permute.xlu0 %577
  %581 = vset.pattern.permute.xlu0 0
  %582 = vperm.xlu0 %581, %v568
  %v583 = vpop.permute.xlu0 %582
  %586 = vset.pattern.permute.xlu0 0
  %587 = vperm.xlu0 %586, %v569
  %v588 = vpop.permute.xlu0 %587
  %v590 = vadd.f32 %v561, %v573
  %v591 = vadd.f32 %v562, %v578
  %v592 = vadd.f32 %v563, %v583
  %v593 = vadd.f32 %v564, %v588
  %v594 = vld [vmem:[%s5] sm:$0xff]
  %v595 = vld [vmem:[%s5 + $0x8] sm:$0xff]
  %v596 = vld [vmem:[%s5 + $0x10] sm:$0xff]
  %v597 = vld [vmem:[%s5 + $0x18] sm:$0xff]
  %602 = vrot.lane.b32.xlu0 %v590, 127
  %v603 = vpop.permute.xlu0 %602
  %604 = vrot.lane.b32.xlu0 %v591, 127
  %v605 = vpop.permute.xlu0 %604
  %606 = vrot.lane.b32.xlu0 %v592, 127
  %v607 = vpop.permute.xlu0 %606
  %608 = vrot.lane.b32.xlu0 %v593, 127
  %v609 = vpop.permute.xlu0 %608
  %v614 = vsel %vm64, %v603, 0.0
  %v615 = vsel %vm64, %v605, 0.0
  %v616 = vsel %vm64, %v607, 0.0
  %v617 = vsel %vm64, %v609, 0.0
  %618 = vrot.lane.b32.xlu0 %v590, 1
  %v619 = vpop.permute.xlu0 %618
  %620 = vrot.lane.b32.xlu0 %v591, 1
  %v621 = vpop.permute.xlu0 %620
  %622 = vrot.lane.b32.xlu0 %v592, 1
  %v623 = vpop.permute.xlu0 %622
  %624 = vrot.lane.b32.xlu0 %v593, 1
  %v625 = vpop.permute.xlu0 %624
  %v630 = vsel %vm73, 0.0, %v619
  %v631 = vsel %vm73, 0.0, %v621
  %v632 = vsel %vm73, 0.0, %v623
  %v633 = vsel %vm73, 0.0, %v625
  %v634 = vsel %vm77, %v614, 0.0
  %v635 = vsel %vm77, %v615, 0.0
  %v636 = vsel %vm77, %v616, 0.0
  %v637 = vsel %vm77, %v617, 0.0
  %v638 = vsel %vm81, %v630, 0.0
  %v639 = vsel %vm81, %v631, 0.0
  %v640 = vsel %vm81, %v632, 0.0
  %v641 = vsel %vm81, %v633, 0.0
  %v642 = vld [vmem:[%s6] sm:$0xff]
  %v643 = vld [vmem:[%s6 + $0x8] sm:$0xff]
  %v644 = vld [vmem:[%s6 + $0x10] sm:$0xff]
  %v645 = vld [vmem:[%s6 + $0x18] sm:$0xff]
  %647 = vset.pattern.permute.xlu0 0
  %648 = vperm.xlu0 %647, %v642
  %v649 = vpop.permute.xlu0 %648
  %652 = vset.pattern.permute.xlu0 0
  %653 = vperm.xlu0 %652, %v643
  %v654 = vpop.permute.xlu0 %653
  %657 = vset.pattern.permute.xlu0 0
  %658 = vperm.xlu0 %657, %v644
  %v659 = vpop.permute.xlu0 %658
  %662 = vset.pattern.permute.xlu0 0
  %663 = vperm.xlu0 %662, %v645
  %v664 = vpop.permute.xlu0 %663
  %vm666 = vcmask 785408
  %v668 = vsel %vm666, %v594, 0
  %v671 = vsel %vm666, %v595, 0
  %v674 = vsel %vm666, %v596, 0
  %v677 = vsel %vm666, %v597, 0
  %679 = vmatprep.subr.mxu0 0.0
  %680 = vmatpush1.msra.mxu0 %v634
  %681 = vmatprep.subr.mxu0 0.0
  %682 = vmatpush1.msra.mxu0 %v635
  %683 = vmatprep.subr.mxu0 0.0
  %684 = vmatpush1.msra.mxu0 %v636
  %685 = vmatprep.subr.mxu0 0.0
  %686 = vmatpush1.msra.mxu0 %v637
  %687 = vmatprep.subr.mxu0 0.0
  %688 = vmatpush1.msra.mxu0 %v590
  %689 = vmatprep.subr.mxu0 0.0
  %690 = vmatpush1.msra.mxu0 %v591
  %691 = vmatprep.subr.mxu0 0.0
  %692 = vmatpush1.msra.mxu0 %v592
  %693 = vmatprep.subr.mxu0 0.0
  %694 = vmatpush1.msra.mxu0 %v593
  %695 = vmatprep.subr.mxu0 0.0
  %696 = vmatpush1.msra.mxu0 %v638
  %697 = vmatprep.subr.mxu0 0.0
  %698 = vmatpush1.msra.mxu0 %v639
  %699 = vmatprep.subr.mxu0 0.0
  %700 = vmatpush1.msra.mxu0 %v640
  %701 = vmatprep.subr.mxu0 0.0
  %702 = vmatpush1.msra.mxu0 %v641
  %703 = vmatprep.subr.mxu0 0.0
  %704 = vmatpush1.msra.mxu0 0.0
  %705 = vmatprep.subr.mxu0 0.0
  %706 = vmatpush1.msra.mxu0 0.0
  %707 = vmatprep.subr.mxu0 0.0
  %708 = vmatpush1.msra.mxu0 0.0
  %709 = vmatprep.subr.mxu0 0.0
  %710 = vmatpush1.msra.mxu0 0.0
  %711 = vmatprep.subr.mxu0 0.0
  %712 = vmatpush1.msra.mxu0 0.0
  %713 = vmatprep.subr.mxu0 0.0
  %714 = vmatpush1.msra.mxu0 0.0
  %715 = vmatprep.subr.mxu0 0.0
  %716 = vmatpush1.msra.mxu0 0.0
  %717 = vmatprep.subr.mxu0 0.0
  %718 = vmatpush1.msra.mxu0 0.0
  %719 = vmatprep.subr.mxu0 0.0
  %720 = vmatpush1.msra.mxu0 0.0
  %721 = vmatprep.subr.mxu0 0.0
  %722 = vmatpush1.msra.mxu0 0.0
  %723 = vmatprep.subr.mxu0 0.0
  %724 = vmatpush1.msra.mxu0 0.0
  %725 = vmatprep.subr.mxu0 0.0
  %726 = vmatpush1.msra.mxu0 0.0
  %727 = vmatprep.subr.mxu0 0.0
  %728 = vmatpush1.msra.mxu0 0.0
  %729 = vmatprep.subr.mxu0 0.0
  %730 = vmatpush1.msra.mxu0 0.0
  %731 = vmatprep.subr.mxu0 0.0
  %732 = vmatpush1.msra.mxu0 0.0
  %733 = vmatprep.subr.mxu0 0.0
  %734 = vmatpush1.msra.mxu0 0.0
  %735 = vmatprep.subr.mxu0 0.0
  %736 = vmatpush1.msra.mxu0 0.0
  %737 = vmatprep.subr.mxu0 0.0
  %738 = vmatpush1.msra.mxu0 0.0
  %739 = vmatprep.subr.mxu0 0.0
  %740 = vmatpush1.msra.mxu0 0.0
  %741 = vmatprep.subr.mxu0 0.0
  %742 = vmatpush1.msra.mxu0 0.0
  %743 = vmatprep.mubr.f32.mxu0 0.0
  %744 = vmatmul.mubr.f32.gmra.mrb[0].mxu0 %v668
  %v745 = vpop.f32.mrb[0].mxu0
  %v746 = vadd.f32 %v649, %v745
  %v747 = vpop.f32.mrb[0].mxu0
  %748 = vmatprep.mubr.f32.mxu0 0.0
  %749 = vmatmul.mubr.f32.gmra.mrb[0].mxu0 %v671
  %v750 = vpop.f32.mrb[0].mxu0
  %v751 = vadd.f32 %v654, %v750
  %v752 = vpop.f32.mrb[0].mxu0
  %753 = vmatprep.mubr.f32.mxu0 0.0
  %754 = vmatmul.mubr.f32.gmra.mrb[0].mxu0 %v674
  %v755 = vpop.f32.mrb[0].mxu0
  %v756 = vadd.f32 %v659, %v755
  %v757 = vpop.f32.mrb[0].mxu0
  %758 = vmatprep.mubr.f32.mxu0 0.0
  %759 = vmatmul.mubr.f32.gmra.mrb[0].mxu0 %v677
  %v760 = vpop.f32.mrb[0].mxu0
  %v761 = vadd.f32 %v664, %v760
  %v762 = vpop.f32.mrb[0].mxu0
  %763 = vdwg.mxu0
  %764 = vst.msk [vmem:[%s7] sm:$0xff] %vm430, %v746
  %765 = vst.msk [vmem:[%s7 + $0x8] sm:$0xff] %vm430, %v751
  %766 = vst.msk [vmem:[%s7 + $0x10] sm:$0xff] %vm430, %v756
  %767 = vst.msk [vmem:[%s7 + $0x18] sm:$0xff] %vm430, %v761
  // Predicated region
  $region30: #{tpu_custom_call.1} parent=0 // pred_check
    _
  $region31: #{tpu_custom_call.1} parent=0 // pred_check_branch
    %769 = sbr.rel (0) target = $region33
  $region32: #{tpu_custom_call.1} parent=0 // pred_region
    _
  $region33: #{tpu_custom_call.1} parent=0 // pred_fallthru
    _
  // Predicated region
  $region34: #{tpu_custom_call.1} parent=0 // pred_check
    _
  $region35: #{tpu_custom_call.1} parent=0 // pred_check_branch
    %771 = sbr.rel (0) target = $region37
  $region36: #{tpu_custom_call.1} parent=0 // pred_region
    _
  $region37: #{tpu_custom_call.1} parent=0 // pred_fallthru
    _

</llo_original>
